<compile_context>
chip_gen: v7x
topology: tpu7x:2x2x1
jax: 0.10.0
libtpu: 0.0.40
codegen_flags: <defaults>
</compile_context>

<pallas_src>
import jax
import jax.numpy as jnp
from jax.experimental import pallas as pl
from jax.experimental.pallas import tpu as pltpu

LANE = 128
SUBLANE = 8


def _round_up(n, m):
    return ((n + m - 1) // m) * m


# --------------------------------------------------------------------------
# Kernel: one batch tile -> h2 tile + fused (mu|std) head tile.
# --------------------------------------------------------------------------
def encoder_kernel(x_ref,
                   w1_ref, b1_ref,
                   w2_ref, b2_ref,
                   wh_ref, bh_ref,
                   h2_ref, head_ref):
    cdt = w1_ref.dtype  # compute dtype of the matmul operands (f32 or bf16)
    x = x_ref[...]

    # e1: Linear(in -> hidden1), f32 accumulation, bias add in f32.
    h1 = jnp.dot(x.astype(cdt), w1_ref[...],
                 preferred_element_type=jnp.float32) + b1_ref[...]

    # e2: Linear(hidden1 -> hidden2)
    h2 = jnp.dot(h1.astype(cdt), w2_ref[...],
                 preferred_element_type=jnp.float32) + b2_ref[...]
    h2_ref[...] = h2.astype(h2_ref.dtype)

    # Fused heads: [mu | std] = h2 @ [Wmu | Wstd] + [bmu | bstd]
    head = jnp.dot(h2.astype(cdt), wh_ref[...],
                   preferred_element_type=jnp.float32) + bh_ref[...]
    head_ref[...] = head.astype(head_ref.dtype)


# --------------------------------------------------------------------------
# One-time parameter preparation: transpose (out,in)->(in,out), fuse the two
# heads, zero-pad feature dims to multiples of 128, cast matmul operands.
# --------------------------------------------------------------------------
def prepare_params(params, compute_dtype=jnp.float32):
    in_dim = params["e1_w"].shape[1]
    hidden1 = params["e1_w"].shape[0]
    hidden2 = params["e2_w"].shape[0]
    z_dim = params["mu_w"].shape[0]

    in_p = _round_up(in_dim, LANE)
    h1_p = _round_up(hidden1, LANE)
    h2_p = _round_up(hidden2, LANE)
    hd_p = _round_up(2 * z_dim, LANE)

    def pad2(w, rows, cols):
        return jnp.pad(w, ((0, rows - w.shape[0]), (0, cols - w.shape[1])))

    def pad_bias(b, cols):
        return jnp.pad(b, (0, cols - b.shape[0]))[None, :].astype(jnp.float32)

    w1 = pad2(params["e1_w"].T, in_p, h1_p).astype(compute_dtype)
    w2 = pad2(params["e2_w"].T, h1_p, h2_p).astype(compute_dtype)
    wh = pad2(jnp.concatenate([params["mu_w"].T, params["std_w"].T], axis=1),
              h2_p, hd_p).astype(compute_dtype)

    b1 = pad_bias(params["e1_b"], h1_p)
    b2 = pad_bias(params["e2_b"], h2_p)
    bh = pad_bias(jnp.concatenate([params["mu_b"], params["std_b"]]), hd_p)

    prep = dict(w1=w1, b1=b1, w2=w2, b2=b2, wh=wh, bh=bh)
    dims = dict(in_dim=in_dim, hidden1=hidden1, hidden2=hidden2, z_dim=z_dim,
                in_p=in_p, h1_p=h1_p, h2_p=h2_p, hd_p=hd_p)
    return prep, dims


# --------------------------------------------------------------------------
# Forward wrapper.
# --------------------------------------------------------------------------
def encoder_forward(x, prep, dims, vmem_budget_bytes=32 * 1024 * 1024):
    B = x.shape[0]
    in_dim = dims["in_dim"]
    hidden2, z_dim = dims["hidden2"], dims["z_dim"]
    in_p, h1_p, h2_p, hd_p = dims["in_p"], dims["h1_p"], dims["h2_p"], dims["hd_p"]

    cbytes = jnp.dtype(prep["w1"].dtype).itemsize
    weight_bytes = (in_p * h1_p + h1_p * h2_p + h2_p * hd_p) * cbytes \
                   + (h1_p + h2_p + hd_p) * 4
    act_row_bytes = (in_p + h1_p + h2_p + hd_p) * 4

    # Pick TILE_B (multiple of 8) that fits the VMEM budget with
    # double-buffered activations + resident (conservatively 2x) weights.
    tile_b = min(_round_up(B, SUBLANE), 512)
    while tile_b > SUBLANE:
        need = 2 * weight_bytes + 3 * tile_b * act_row_bytes
        if need <= vmem_budget_bytes:
            break
        tile_b = max(SUBLANE, (tile_b // 2 // SUBLANE) * SUBLANE)
    b_pad = _round_up(B, tile_b)

    x_p = x
    if b_pad != B or in_p != in_dim:
        x_p = jnp.pad(x, ((0, b_pad - B), (0, in_p - in_dim)))

    grid = (b_pad // tile_b,)

    flops = 2 * b_pad * (in_p * h1_p + h1_p * h2_p + h2_p * hd_p)
    bytes_accessed = (b_pad * in_p * 4 + weight_bytes
                      + b_pad * (h2_p + hd_p) * 4)
    vmem_need = 2 * weight_bytes + 4 * tile_b * act_row_bytes
    vmem_limit = int(min(max(vmem_need, 16 * 1024 * 1024), 48 * 1024 * 1024))

    h2_out, head_out = pl.pallas_call(
        encoder_kernel,
        out_shape=(
            jax.ShapeDtypeStruct((b_pad, h2_p), jnp.float32),
            jax.ShapeDtypeStruct((b_pad, hd_p), jnp.float32),
        ),
        grid_spec=pltpu.PrefetchScalarGridSpec(
            num_scalar_prefetch=0,
            grid=grid,
            in_specs=[
                pl.BlockSpec((tile_b, in_p), lambda i: (i, 0)),   # x tile
                pl.BlockSpec((in_p, h1_p), lambda i: (0, 0)),     # w1 (resident)
                pl.BlockSpec((1, h1_p), lambda i: (0, 0)),        # b1
                pl.BlockSpec((h1_p, h2_p), lambda i: (0, 0)),     # w2
                pl.BlockSpec((1, h2_p), lambda i: (0, 0)),        # b2
                pl.BlockSpec((h2_p, hd_p), lambda i: (0, 0)),     # W_head
                pl.BlockSpec((1, hd_p), lambda i: (0, 0)),        # b_head
            ],
            out_specs=[
                pl.BlockSpec((tile_b, h2_p), lambda i: (i, 0)),   # h2 tile
                pl.BlockSpec((tile_b, hd_p), lambda i: (i, 0)),   # (mu|std) tile
            ],
        ),
        compiler_params=pltpu.CompilerParams(
            dimension_semantics=("parallel",),
            vmem_limit_bytes=vmem_limit,
        ),
        cost_estimate=pl.CostEstimate(
            flops=flops, transcendentals=0, bytes_accessed=bytes_accessed),
    )(x_p, prep["w1"], prep["b1"], prep["w2"], prep["b2"],
      prep["wh"], prep["bh"])

    h2 = h2_out[:B, :hidden2]
    mu = head_out[:B, :z_dim]
    std = head_out[:B, z_dim:2 * z_dim]
    return h2, mu, std


# --------------------------------------------------------------------------
# Synthetic PyTorch-layout parameters + plain-JAX reference.
# --------------------------------------------------------------------------
def init_params(key, in_dim, hidden_dim1, hidden_dim2, z_dim):
    ks = jax.random.split(key, 8)

    def lin(kw, kb, fan_in, fan_out):
        bound = 1.0 / (fan_in ** 0.5)
        w = jax.random.uniform(kw, (fan_out, fan_in), jnp.float32, -bound, bound)
        b = jax.random.uniform(kb, (fan_out,), jnp.float32, -bound, bound)
        return w, b

    e1_w, e1_b = lin(ks[0], ks[1], in_dim, hidden_dim1)
    e2_w, e2_b = lin(ks[2], ks[3], hidden_dim1, hidden_dim2)
    mu_w, mu_b = lin(ks[4], ks[5], hidden_dim2, z_dim)
    std_w, std_b = lin(ks[6], ks[7], hidden_dim2, z_dim)
    return dict(e1_w=e1_w, e1_b=e1_b, e2_w=e2_w, e2_b=e2_b,
                mu_w=mu_w, mu_b=mu_b, std_w=std_w, std_b=std_b)


def encoder_reference(x, p):
    h1 = x @ p["e1_w"].T + p["e1_b"]
    h2 = h1 @ p["e2_w"].T + p["e2_b"]
    mu = h2 @ p["mu_w"].T + p["mu_b"]
    std = h2 @ p["std_w"].T + p["std_b"]
    return h2, mu, std


if __name__ == "__main__":
    B, IN_DIM, H1, H2, Z = 8, 64, 32, 32, 8

    key = jax.random.PRNGKey(0)
    kx, kp = jax.random.split(key)
    x = jax.random.normal(kx, (B, IN_DIM), jnp.float32)
    params = init_params(kp, IN_DIM, H1, H2, Z)
    h2_r, mu_r, std_r = encoder_reference(x, params)

    # f32 matmul operands: bit-tight validation.
    prep32, dims = prepare_params(params, compute_dtype=jnp.float32)
    h2, mu, std = encoder_forward(x, prep32, dims)
    jax.block_until_ready((h2, mu, std))
    assert jnp.allclose(h2, h2_r, atol=1e-5, rtol=1e-5)
    assert jnp.allclose(mu, mu_r, atol=1e-5, rtol=1e-5)
    assert jnp.allclose(std, std_r, atol=1e-5, rtol=1e-5)

    # bf16 matmul operands (f32 accumulation) for v6e/v7x: looser tolerance.
    prep16, dims16 = prepare_params(params, compute_dtype=jnp.bfloat16)
    h2b, mub, stdb = encoder_forward(x, prep16, dims16)
    jax.block_until_ready((h2b, mub, stdb))
    assert jnp.allclose(h2b, h2_r, atol=1e-1, rtol=1e-1)
    assert jnp.allclose(mub, mu_r, atol=1e-1, rtol=1e-1)
    assert jnp.allclose(stdb, std_r, atol=1e-1, rtol=1e-1)

    print("KERNEL_OK")
</pallas_src>

<mosaic_0001>
module attributes {stable_mosaic.version = 11 : i64} {
  func.func @encoder_kernel(%arg0: i32, %arg1: memref<8x128xf32, #tpu.memory_space<vmem>>, %arg2: memref<128x128xf32, #tpu.memory_space<vmem>>, %arg3: memref<1x128xf32, #tpu.memory_space<vmem>>, %arg4: memref<128x128xf32, #tpu.memory_space<vmem>>, %arg5: memref<1x128xf32, #tpu.memory_space<vmem>>, %arg6: memref<128x128xf32, #tpu.memory_space<vmem>>, %arg7: memref<1x128xf32, #tpu.memory_space<vmem>>, %arg8: memref<8x128xf32, #tpu.memory_space<vmem>>, %arg9: memref<8x128xf32, #tpu.memory_space<vmem>>) attributes {dimension_semantics = [#tpu.dimension_semantics<parallel>], iteration_bounds = array<i64: 1>, scalar_prefetch = 0 : i64, scratch_operands = 0 : i64, tpu.core_type = #tpu.core_type<tc>, window_params = [{transform_indices = @transform_0, window_bounds = array<i64: 8, 128>}, {pipeline_mode = #tpu.pipeline_mode<synchronous>, transform_indices = @transform_1, window_bounds = array<i64: 128, 128>}, {pipeline_mode = #tpu.pipeline_mode<synchronous>, transform_indices = @transform_2, window_bounds = array<i64: 1, 128>}, {pipeline_mode = #tpu.pipeline_mode<synchronous>, transform_indices = @transform_3, window_bounds = array<i64: 128, 128>}, {pipeline_mode = #tpu.pipeline_mode<synchronous>, transform_indices = @transform_4, window_bounds = array<i64: 1, 128>}, {pipeline_mode = #tpu.pipeline_mode<synchronous>, transform_indices = @transform_5, window_bounds = array<i64: 128, 128>}, {pipeline_mode = #tpu.pipeline_mode<synchronous>, transform_indices = @transform_6, window_bounds = array<i64: 1, 128>}, {transform_indices = @transform_7, window_bounds = array<i64: 8, 128>}, {transform_indices = @transform_8, window_bounds = array<i64: 8, 128>}]} {
    %c0 = arith.constant 0 : index
    %c0_0 = arith.constant 0 : index
    %0 = vector.load %arg1[%c0, %c0_0] : memref<8x128xf32, #tpu.memory_space<vmem>>, vector<8x128xf32>
    %c0_1 = arith.constant 0 : index
    %c0_2 = arith.constant 0 : index
    %1 = vector.load %arg2[%c0_1, %c0_2] : memref<128x128xf32, #tpu.memory_space<vmem>>, vector<128x128xf32>
    %cst = arith.constant dense<0.000000e+00> : vector<8x128xf32>
    %2 = tpu.matmul %0, %1, %cst {dimension_numbers = #tpu.dot_dimension_numbers<[1], [0], [0], [1], [0, 0, 1, 1], [], []>} : vector<8x128xf32>, vector<128x128xf32>, vector<8x128xf32> -> vector<8x128xf32>
    %c0_3 = arith.constant 0 : index
    %c0_4 = arith.constant 0 : index
    %3 = vector.load %arg3[%c0_3, %c0_4] : memref<1x128xf32, #tpu.memory_space<vmem>>, vector<1x128xf32>
    %4 = vector.broadcast %3 : vector<1x128xf32> to vector<8x128xf32>
    %5 = arith.addf %2, %4 : vector<8x128xf32>
    %c0_5 = arith.constant 0 : index
    %c0_6 = arith.constant 0 : index
    %6 = vector.load %arg4[%c0_5, %c0_6] : memref<128x128xf32, #tpu.memory_space<vmem>>, vector<128x128xf32>
    %cst_7 = arith.constant dense<0.000000e+00> : vector<8x128xf32>
    %7 = tpu.matmul %5, %6, %cst_7 {dimension_numbers = #tpu.dot_dimension_numbers<[1], [0], [0], [1], [0, 0, 1, 1], [], []>} : vector<8x128xf32>, vector<128x128xf32>, vector<8x128xf32> -> vector<8x128xf32>
    %c0_8 = arith.constant 0 : index
    %c0_9 = arith.constant 0 : index
    %8 = vector.load %arg5[%c0_8, %c0_9] : memref<1x128xf32, #tpu.memory_space<vmem>>, vector<1x128xf32>
    %9 = vector.broadcast %8 : vector<1x128xf32> to vector<8x128xf32>
    %10 = arith.addf %7, %9 : vector<8x128xf32>
    %c0_10 = arith.constant 0 : index
    %c0_11 = arith.constant 0 : index
    %11 = vector.load %arg8[%c0_10, %c0_11] : memref<8x128xf32, #tpu.memory_space<vmem>>, vector<8x128xf32>
    tpu.vector_store %arg8[%c0_10, %c0_11], %10 {strides = array<i32>} : memref<8x128xf32, #tpu.memory_space<vmem>>, vector<8x128xf32>,
    %c0_12 = arith.constant 0 : index
    %c0_13 = arith.constant 0 : index
    %12 = vector.load %arg6[%c0_12, %c0_13] : memref<128x128xf32, #tpu.memory_space<vmem>>, vector<128x128xf32>
    %cst_14 = arith.constant dense<0.000000e+00> : vector<8x128xf32>
    %13 = tpu.matmul %10, %12, %cst_14 {dimension_numbers = #tpu.dot_dimension_numbers<[1], [0], [0], [1], [0, 0, 1, 1], [], []>} : vector<8x128xf32>, vector<128x128xf32>, vector<8x128xf32> -> vector<8x128xf32>
    %c0_15 = arith.constant 0 : index
    %c0_16 = arith.constant 0 : index
    %14 = vector.load %arg7[%c0_15, %c0_16] : memref<1x128xf32, #tpu.memory_space<vmem>>, vector<1x128xf32>
    %15 = vector.broadcast %14 : vector<1x128xf32> to vector<8x128xf32>
    %16 = arith.addf %13, %15 : vector<8x128xf32>
    %c0_17 = arith.constant 0 : index
    %c0_18 = arith.constant 0 : index
    %17 = vector.load %arg9[%c0_17, %c0_18] : memref<8x128xf32, #tpu.memory_space<vmem>>, vector<8x128xf32>
    tpu.vector_store %arg9[%c0_17, %c0_18], %16 {strides = array<i32>} : memref<8x128xf32, #tpu.memory_space<vmem>>, vector<8x128xf32>,
    return
  }
  func.func @transform_0(%arg0: i32) -> (i32, i32) {
    %c0_i32 = arith.constant 0 : i32
    %c0_i32_0 = arith.constant 0 : i32
    return %arg0, %c0_i32 : i32, i32
  }
  func.func @transform_1(%arg0: i32) -> (i32, i32) {
    %c0_i32 = arith.constant 0 : i32
    %c0_i32_0 = arith.constant 0 : i32
    %c0_i32_1 = arith.constant 0 : i32
    return %c0_i32, %c0_i32_0 : i32, i32
  }
  func.func @transform_2(%arg0: i32) -> (i32, i32) {
    %c0_i32 = arith.constant 0 : i32
    %c0_i32_0 = arith.constant 0 : i32
    %c0_i32_1 = arith.constant 0 : i32
    return %c0_i32, %c0_i32_0 : i32, i32
  }
  func.func @transform_3(%arg0: i32) -> (i32, i32) {
    %c0_i32 = arith.constant 0 : i32
    %c0_i32_0 = arith.constant 0 : i32
    %c0_i32_1 = arith.constant 0 : i32
    return %c0_i32, %c0_i32_0 : i32, i32
  }
  func.func @transform_4(%arg0: i32) -> (i32, i32) {
    %c0_i32 = arith.constant 0 : i32
    %c0_i32_0 = arith.constant 0 : i32
    %c0_i32_1 = arith.constant 0 : i32
    return %c0_i32, %c0_i32_0 : i32, i32
  }
  func.func @transform_5(%arg0: i32) -> (i32, i32) {
    %c0_i32 = arith.constant 0 : i32
    %c0_i32_0 = arith.constant 0 : i32
    %c0_i32_1 = arith.constant 0 : i32
    return %c0_i32, %c0_i32_0 : i32, i32
  }
  func.func @transform_6(%arg0: i32) -> (i32, i32) {
    %c0_i32 = arith.constant 0 : i32
    %c0_i32_0 = arith.constant 0 : i32
    %c0_i32_1 = arith.constant 0 : i32
    return %c0_i32, %c0_i32_0 : i32, i32
  }
  func.func @transform_7(%arg0: i32) -> (i32, i32) {
    %c0_i32 = arith.constant 0 : i32
    %c0_i32_0 = arith.constant 0 : i32
    return %arg0, %c0_i32 : i32, i32
  }
  func.func @transform_8(%arg0: i32) -> (i32, i32) {
    %c0_i32 = arith.constant 0 : i32
    %c0_i32_0 = arith.constant 0 : i32
    return %arg0, %c0_i32 : i32, i32
  }
}

</mosaic_0001>

<llo_original>
// kernel: tpu_custom_call.1
$region0: #{tpu_custom_call.1}
  #allocation0 [shape = 'u32[]', space=smem, size = 0x4, offset = 0x4, fixed_abs, tag = 'smem constant byte address 0x4 - core index']
  #allocation1 [shape = 'u32[144,128]{1,0:T(1,128)}', space=vmem, size = 0x12000, scoped, tag = 'internal scratch']
  %s0 = inlined_call_operand.hbm [shape: f32[8,128], index: 0, kind: input, shape index: {}]
  %s1 = inlined_call_operand.hbm [shape: f32[128,128], index: 1, kind: input, shape index: {}]
  %s2 = inlined_call_operand.vmem [shape: f32[1,128], index: 2, kind: input, shape index: {}]
  %s3 = inlined_call_operand.hbm [shape: f32[128,128], index: 3, kind: input, shape index: {}]
  %s4 = inlined_call_operand.vmem [shape: f32[1,128], index: 4, kind: input, shape index: {}]
  %s5 = inlined_call_operand.hbm [shape: f32[128,128], index: 5, kind: input, shape index: {}]
  %s6 = inlined_call_operand.vmem [shape: f32[1,128], index: 6, kind: input, shape index: {}]
  %s7 = inlined_call_operand.hbm [shape: f32[8,128], index: 7, kind: output, shape index: {0}]
  %s8 = inlined_call_operand.hbm [shape: f32[8,128], index: 8, kind: output, shape index: {1}]
  %9 = xla_tuple %s7, %s8
  %s10 = sld [smem:[#allocation0]]
  $region62: #{tpu_custom_call.1} parent=0
    _
  %s12 = ssub.s32 1, %s10
  %s13 = scalar_select 0, %s12, %s10
  $region1: #{tpu_custom_call.1} parent=0
    #allocation2 [shape = 'u8[4096]{0}', space=vmem, size = 0x1000, scoped, tag = 'input window, operand 0, single buffered']
    #allocation3 [shape = 's32[1]{0}', space=sflag, size = 0x4, scoped, tag = 'scoped memory for tpu_custom_call.1']
    #allocation4 [shape = 's32[1]{0}', space=sflag, size = 0x4, scoped, tag = 'scoped memory for tpu_custom_call.1']
    #allocation5 [shape = 'u8[65536]{0}', space=vmem, size = 0x10000, scoped, tag = 'input window, operand 1, single buffered']
    #allocation6 [shape = 's32[1]{0}', space=sflag, size = 0x4, scoped, tag = 'scoped memory for tpu_custom_call.1']
    #allocation7 [shape = 'u8[65536]{0}', space=vmem, size = 0x10000, scoped, tag = 'input window, operand 3, single buffered']
    #allocation8 [shape = 'u8[65536]{0}', space=vmem, size = 0x10000, scoped, tag = 'input window, operand 5, single buffered']
    #allocation9 [shape = 's32[1]{0}', space=sflag, size = 0x4, scoped, tag = 'scoped memory for tpu_custom_call.1']
    #allocation10 [shape = 'u8[4096]{0}', space=vmem, size = 0x1000, scoped, tag = 'output window, operand 0, single buffered']
    #allocation11 [shape = 'u8[4096]{0}', space=vmem, size = 0x1000, scoped, tag = 'output window, operand 1, single buffered']
    #allocation12 [shape = 's32[1]{0}', space=sflag, size = 0x4, scoped, tag = 'scoped memory for tpu_custom_call.1']
    %14 = vsyncpa [#allocation3], 0
    %15 = vsyncpa [#allocation6], 0
    %16 = vsyncpa [#allocation9], 0
    %17 = vsyncpa [#allocation4], 0
    %18 = vsyncpa [#allocation12], 0
    // Predicated region
    $region2: #{tpu_custom_call.1} parent=1 // pred_check
      _
    $region3: #{tpu_custom_call.1} parent=1 // pred_check_branch
      %20 = sbr.rel (0) target = $region5
    $region4: #{tpu_custom_call.1} parent=1 // pred_region
      %s22 = ssub.s32 128, 128
      %23 = vsyncadd [#allocation3], %s22
      %s25 = sshll.u32 [#allocation2], 4
      %s26 = int_to_ptr.vmem [resolvable:$true] %s25
      %28 = dma.hbm_to_vmem [thread:$0]  %s0, 128, %s26, [#allocation3]
    $region5: #{tpu_custom_call.1} parent=1 // pred_fallthru
      _
    // Predicated region
    $region6: #{tpu_custom_call.1} parent=1 // pred_check
      _
    $region7: #{tpu_custom_call.1} parent=1 // pred_check_branch
      %30 = sbr.rel (0) target = $region9
    $region8: #{tpu_custom_call.1} parent=1 // pred_region
      %s32 = ssub.s32 2048, 2048
      %33 = vsyncadd [#allocation6], %s32
      %s34 = sshll.u32 [#allocation5], 4
      %s35 = int_to_ptr.vmem [resolvable:$true] %s34
      %40 = dma.hbm_to_vmem [thread:$0]  %s1, 2048, %s35, [#allocation6], 128, 128, 8
    $region9: #{tpu_custom_call.1} parent=1 // pred_fallthru
      _
    // Predicated region
    $region10: #{tpu_custom_call.1} parent=1 // pred_check
      _
    $region11: #{tpu_custom_call.1} parent=1 // pred_check_branch
      %42 = sbr.rel (0) target = $region13
    $region12: #{tpu_custom_call.1} parent=1 // pred_region
      _
    $region13: #{tpu_custom_call.1} parent=1 // pred_fallthru
      _
    // Predicated region
    $region14: #{tpu_custom_call.1} parent=1 // pred_check
      _
    $region15: #{tpu_custom_call.1} parent=1 // pred_check_branch
      %44 = sbr.rel (0) target = $region17
    $region16: #{tpu_custom_call.1} parent=1 // pred_region
      %s46 = ssub.s32 2048, 2048
      %47 = vsyncadd [#allocation6], %s46
      %s48 = sshll.u32 [#allocation7], 4
      %s49 = int_to_ptr.vmem [resolvable:$true] %s48
      %54 = dma.hbm_to_vmem [thread:$0]  %s3, 2048, %s49, [#allocation6], 128, 128, 8
    $region17: #{tpu_custom_call.1} parent=1 // pred_fallthru
      _
    // Predicated region
    $region18: #{tpu_custom_call.1} parent=1 // pred_check
      _
    $region19: #{tpu_custom_call.1} parent=1 // pred_check_branch
      %56 = sbr.rel (0) target = $region21
    $region20: #{tpu_custom_call.1} parent=1 // pred_region
      _
    $region21: #{tpu_custom_call.1} parent=1 // pred_fallthru
      _
    // Predicated region
    $region22: #{tpu_custom_call.1} parent=1 // pred_check
      _
    $region23: #{tpu_custom_call.1} parent=1 // pred_check_branch
      %58 = sbr.rel (0) target = $region25
    $region24: #{tpu_custom_call.1} parent=1 // pred_region
      %s60 = ssub.s32 2048, 2048
      %61 = vsyncadd [#allocation9], %s60
      %s62 = sshll.u32 [#allocation8], 4
      %s63 = int_to_ptr.vmem [resolvable:$true] %s62
      %68 = dma.hbm_to_vmem [thread:$0]  %s5, 2048, %s63, [#allocation9], 128, 128, 8
    $region25: #{tpu_custom_call.1} parent=1 // pred_fallthru
      _
    // Predicated region
    $region26: #{tpu_custom_call.1} parent=1 // pred_check
      _
    $region27: #{tpu_custom_call.1} parent=1 // pred_check_branch
      %70 = sbr.rel (0) target = $region29
    $region28: #{tpu_custom_call.1} parent=1 // pred_region
      _
    $region29: #{tpu_custom_call.1} parent=1 // pred_fallthru
      _
    // Predicated region
    $region30: #{tpu_custom_call.1} parent=1 // pred_check
      _
    $region31: #{tpu_custom_call.1} parent=1 // pred_check_branch
      %72 = sbr.rel (0) target = $region33
    $region32: #{tpu_custom_call.1} parent=1 // pred_region
      %73 = dma.done [#allocation3], 128
    $region33: #{tpu_custom_call.1} parent=1 // pred_fallthru
      _
    // Predicated region
    $region34: #{tpu_custom_call.1} parent=1 // pred_check
      _
    $region35: #{tpu_custom_call.1} parent=1 // pred_check_branch
      %75 = sbr.rel (0) target = $region37
    $region36: #{tpu_custom_call.1} parent=1 // pred_region
      %76 = dma.done [#allocation6], 2048
    $region37: #{tpu_custom_call.1} parent=1 // pred_fallthru
      _
    // Predicated region
    $region38: #{tpu_custom_call.1} parent=1 // pred_check
      _
    $region39: #{tpu_custom_call.1} parent=1 // pred_check_branch
      %78 = sbr.rel (0) target = $region41
    $region40: #{tpu_custom_call.1} parent=1 // pred_region
      %79 = dma.done [#allocation6], 2048
    $region41: #{tpu_custom_call.1} parent=1 // pred_fallthru
      _
    // Predicated region
    $region42: #{tpu_custom_call.1} parent=1 // pred_check
      _
    $region43: #{tpu_custom_call.1} parent=1 // pred_check_branch
      %81 = sbr.rel (0) target = $region45
    $region44: #{tpu_custom_call.1} parent=1 // pred_region
      %82 = dma.done [#allocation9], 2048
    $region45: #{tpu_custom_call.1} parent=1 // pred_fallthru
      _
    %v83 = vld [vmem:[#allocation2] sm:$0xff]
    %v84 = vld [vmem:[#allocation5] sm:$0xff]
    %v85 = vld [vmem:[#allocation5 + $0x8] sm:$0xff]
    %v86 = vld [vmem:[#allocation5 + $0x10] sm:$0xff]
    %v87 = vld [vmem:[#allocation5 + $0x18] sm:$0xff]
    %v88 = vld [vmem:[#allocation5 + $0x20] sm:$0xff]
    %v89 = vld [vmem:[#allocation5 + $0x28] sm:$0xff]
    %v90 = vld [vmem:[#allocation5 + $0x30] sm:$0xff]
    %v91 = vld [vmem:[#allocation5 + $0x38] sm:$0xff]
    %v92 = vld [vmem:[#allocation5 + $0x40] sm:$0xff]
    %v93 = vld [vmem:[#allocation5 + $0x48] sm:$0xff]
    %v94 = vld [vmem:[#allocation5 + $0x50] sm:$0xff]
    %v95 = vld [vmem:[#allocation5 + $0x58] sm:$0xff]
    %v96 = vld [vmem:[#allocation5 + $0x60] sm:$0xff]
    %v97 = vld [vmem:[#allocation5 + $0x68] sm:$0xff]
    %v98 = vld [vmem:[#allocation5 + $0x70] sm:$0xff]
    %v99 = vld [vmem:[#allocation5 + $0x78] sm:$0xff]
    %v100 = vld [vmem:[%s2] sm:$0x1]
    %v102 = vlaneseq
    %v103 = vshrl.u32 %v102, 7
    %v104 = vsub.s32 0, %v103
    %v105 = vrot.slane %v100, %v104
    %107 = vmatprep.subr.mxu0 0.0
    %108 = vmatpush1.msra.mxu0 %v84
    %109 = vmatprep.subr.mxu0 0.0
    %110 = vmatpush1.msra.mxu0 %v85
    %111 = vmatprep.subr.mxu0 0.0
    %112 = vmatpush1.msra.mxu0 %v86
    %113 = vmatprep.subr.mxu0 0.0
    %114 = vmatpush1.msra.mxu0 %v87
    %115 = vmatprep.subr.mxu0 0.0
    %116 = vmatpush1.msra.mxu0 %v88
    %117 = vmatprep.subr.mxu0 0.0
    %118 = vmatpush1.msra.mxu0 %v89
    %119 = vmatprep.subr.mxu0 0.0
    %120 = vmatpush1.msra.mxu0 %v90
    %121 = vmatprep.subr.mxu0 0.0
    %122 = vmatpush1.msra.mxu0 %v91
    %123 = vmatprep.subr.mxu0 0.0
    %124 = vmatpush1.msra.mxu0 %v92
    %125 = vmatprep.subr.mxu0 0.0
    %126 = vmatpush1.msra.mxu0 %v93
    %127 = vmatprep.subr.mxu0 0.0
    %128 = vmatpush1.msra.mxu0 %v94
    %129 = vmatprep.subr.mxu0 0.0
    %130 = vmatpush1.msra.mxu0 %v95
    %131 = vmatprep.subr.mxu0 0.0
    %132 = vmatpush1.msra.mxu0 %v96
    %133 = vmatprep.subr.mxu0 0.0
    %134 = vmatpush1.msra.mxu0 %v97
    %135 = vmatprep.subr.mxu0 0.0
    %136 = vmatpush1.msra.mxu0 %v98
    %137 = vmatprep.subr.mxu0 0.0
    %138 = vmatpush1.msra.mxu0 %v99
    %139 = vmatprep.subr.mxu0 0.0
    %140 = vmatpush1.msra.mxu0 0.0
    %141 = vmatprep.subr.mxu0 0.0
    %142 = vmatpush1.msra.mxu0 0.0
    %143 = vmatprep.subr.mxu0 0.0
    %144 = vmatpush1.msra.mxu0 0.0
    %145 = vmatprep.subr.mxu0 0.0
    %146 = vmatpush1.msra.mxu0 0.0
    %147 = vmatprep.subr.mxu0 0.0
    %148 = vmatpush1.msra.mxu0 0.0
    %149 = vmatprep.subr.mxu0 0.0
    %150 = vmatpush1.msra.mxu0 0.0
    %151 = vmatprep.subr.mxu0 0.0
    %152 = vmatpush1.msra.mxu0 0.0
    %153 = vmatprep.subr.mxu0 0.0
    %154 = vmatpush1.msra.mxu0 0.0
    %155 = vmatprep.subr.mxu0 0.0
    %156 = vmatpush1.msra.mxu0 0.0
    %157 = vmatprep.subr.mxu0 0.0
    %158 = vmatpush1.msra.mxu0 0.0
    %159 = vmatprep.subr.mxu0 0.0
    %160 = vmatpush1.msra.mxu0 0.0
    %161 = vmatprep.subr.mxu0 0.0
    %162 = vmatpush1.msra.mxu0 0.0
    %163 = vmatprep.subr.mxu0 0.0
    %164 = vmatpush1.msra.mxu0 0.0
    %165 = vmatprep.subr.mxu0 0.0
    %166 = vmatpush1.msra.mxu0 0.0
    %167 = vmatprep.subr.mxu0 0.0
    %168 = vmatpush1.msra.mxu0 0.0
    %169 = vmatprep.subr.mxu0 0.0
    %170 = vmatpush1.msra.mxu0 0.0
    %171 = vmatprep.mubr.f32.mxu0 0.0
    %172 = vmatmul.mubr.f32.gmra.mrb[0].mxu0 %v83
    %v173 = vpop.f32.mrb[0].mxu0
    %v174 = vadd.f32 %v105, %v173
    %v175 = vpop.f32.mrb[0].mxu0
    %176 = vdwg.mxu0
    %v177 = vld [vmem:[#allocation7] sm:$0xff]
    %v178 = vld [vmem:[#allocation7 + $0x8] sm:$0xff]
    %v179 = vld [vmem:[#allocation7 + $0x10] sm:$0xff]
    %v180 = vld [vmem:[#allocation7 + $0x18] sm:$0xff]
    %v181 = vld [vmem:[#allocation7 + $0x20] sm:$0xff]
    %v182 = vld [vmem:[#allocation7 + $0x28] sm:$0xff]
    %v183 = vld [vmem:[#allocation7 + $0x30] sm:$0xff]
    %v184 = vld [vmem:[#allocation7 + $0x38] sm:$0xff]
    %v185 = vld [vmem:[#allocation7 + $0x40] sm:$0xff]
    %v186 = vld [vmem:[#allocation7 + $0x48] sm:$0xff]
    %v187 = vld [vmem:[#allocation7 + $0x50] sm:$0xff]
    %v188 = vld [vmem:[#allocation7 + $0x58] sm:$0xff]
    %v189 = vld [vmem:[#allocation7 + $0x60] sm:$0xff]
    %v190 = vld [vmem:[#allocation7 + $0x68] sm:$0xff]
    %v191 = vld [vmem:[#allocation7 + $0x70] sm:$0xff]
    %v192 = vld [vmem:[#allocation7 + $0x78] sm:$0xff]
    %v193 = vld [vmem:[%s4] sm:$0x1]
    %v195 = vlaneseq
    %v196 = vshrl.u32 %v195, 7
    %v197 = vsub.s32 0, %v196
    %v198 = vrot.slane %v193, %v197
    %200 = vmatprep.subr.mxu0 0.0
    %201 = vmatpush1.msra.mxu0 %v177
    %202 = vmatprep.subr.mxu0 0.0
    %203 = vmatpush1.msra.mxu0 %v178
    %204 = vmatprep.subr.mxu0 0.0
    %205 = vmatpush1.msra.mxu0 %v179
    %206 = vmatprep.subr.mxu0 0.0
    %207 = vmatpush1.msra.mxu0 %v180
    %208 = vmatprep.subr.mxu0 0.0
    %209 = vmatpush1.msra.mxu0 %v181
    %210 = vmatprep.subr.mxu0 0.0
    %211 = vmatpush1.msra.mxu0 %v182
    %212 = vmatprep.subr.mxu0 0.0
    %213 = vmatpush1.msra.mxu0 %v183
    %214 = vmatprep.subr.mxu0 0.0
    %215 = vmatpush1.msra.mxu0 %v184
    %216 = vmatprep.subr.mxu0 0.0
    %217 = vmatpush1.msra.mxu0 %v185
    %218 = vmatprep.subr.mxu0 0.0
    %219 = vmatpush1.msra.mxu0 %v186
    %220 = vmatprep.subr.mxu0 0.0
    %221 = vmatpush1.msra.mxu0 %v187
    %222 = vmatprep.subr.mxu0 0.0
    %223 = vmatpush1.msra.mxu0 %v188
    %224 = vmatprep.subr.mxu0 0.0
    %225 = vmatpush1.msra.mxu0 %v189
    %226 = vmatprep.subr.mxu0 0.0
    %227 = vmatpush1.msra.mxu0 %v190
    %228 = vmatprep.subr.mxu0 0.0
    %229 = vmatpush1.msra.mxu0 %v191
    %230 = vmatprep.subr.mxu0 0.0
    %231 = vmatpush1.msra.mxu0 %v192
    %232 = vmatprep.subr.mxu0 0.0
    %233 = vmatpush1.msra.mxu0 0.0
    %234 = vmatprep.subr.mxu0 0.0
    %235 = vmatpush1.msra.mxu0 0.0
    %236 = vmatprep.subr.mxu0 0.0
    %237 = vmatpush1.msra.mxu0 0.0
    %238 = vmatprep.subr.mxu0 0.0
    %239 = vmatpush1.msra.mxu0 0.0
    %240 = vmatprep.subr.mxu0 0.0
    %241 = vmatpush1.msra.mxu0 0.0
    %242 = vmatprep.subr.mxu0 0.0
    %243 = vmatpush1.msra.mxu0 0.0
    %244 = vmatprep.subr.mxu0 0.0
    %245 = vmatpush1.msra.mxu0 0.0
    %246 = vmatprep.subr.mxu0 0.0
    %247 = vmatpush1.msra.mxu0 0.0
    %248 = vmatprep.subr.mxu0 0.0
    %249 = vmatpush1.msra.mxu0 0.0
    %250 = vmatprep.subr.mxu0 0.0
    %251 = vmatpush1.msra.mxu0 0.0
    %252 = vmatprep.subr.mxu0 0.0
    %253 = vmatpush1.msra.mxu0 0.0
    %254 = vmatprep.subr.mxu0 0.0
    %255 = vmatpush1.msra.mxu0 0.0
    %256 = vmatprep.subr.mxu0 0.0
    %257 = vmatpush1.msra.mxu0 0.0
    %258 = vmatprep.subr.mxu0 0.0
    %259 = vmatpush1.msra.mxu0 0.0
    %260 = vmatprep.subr.mxu0 0.0
    %261 = vmatpush1.msra.mxu0 0.0
    %262 = vmatprep.subr.mxu0 0.0
    %263 = vmatpush1.msra.mxu0 0.0
    %264 = vmatprep.mubr.f32.mxu0 0.0
    %265 = vmatmul.mubr.f32.gmra.mrb[0].mxu0 %v174
    %v266 = vpop.f32.mrb[0].mxu0
    %v267 = vadd.f32 %v198, %v266
    %v268 = vpop.f32.mrb[0].mxu0
    %269 = vdwg.mxu0
    %270 = vst [vmem:[#allocation10] sm:$0xff] %v267
    %v271 = vld [vmem:[#allocation8] sm:$0xff]
    %v272 = vld [vmem:[#allocation8 + $0x8] sm:$0xff]
    %v273 = vld [vmem:[#allocation8 + $0x10] sm:$0xff]
    %v274 = vld [vmem:[#allocation8 + $0x18] sm:$0xff]
    %v275 = vld [vmem:[#allocation8 + $0x20] sm:$0xff]
    %v276 = vld [vmem:[#allocation8 + $0x28] sm:$0xff]
    %v277 = vld [vmem:[#allocation8 + $0x30] sm:$0xff]
    %v278 = vld [vmem:[#allocation8 + $0x38] sm:$0xff]
    %v279 = vld [vmem:[#allocation8 + $0x40] sm:$0xff]
    %v280 = vld [vmem:[#allocation8 + $0x48] sm:$0xff]
    %v281 = vld [vmem:[#allocation8 + $0x50] sm:$0xff]
    %v282 = vld [vmem:[#allocation8 + $0x58] sm:$0xff]
    %v283 = vld [vmem:[#allocation8 + $0x60] sm:$0xff]
    %v284 = vld [vmem:[#allocation8 + $0x68] sm:$0xff]
    %v285 = vld [vmem:[#allocation8 + $0x70] sm:$0xff]
    %v286 = vld [vmem:[#allocation8 + $0x78] sm:$0xff]
    %v287 = vld [vmem:[%s6] sm:$0x1]
    %v289 = vlaneseq
    %v290 = vshrl.u32 %v289, 7
    %v291 = vsub.s32 0, %v290
    %v292 = vrot.slane %v287, %v291
    %294 = vmatprep.subr.mxu0 0.0
    %295 = vmatpush1.msra.mxu0 %v271
    %296 = vmatprep.subr.mxu0 0.0
    %297 = vmatpush1.msra.mxu0 %v272
    %298 = vmatprep.subr.mxu0 0.0
    %299 = vmatpush1.msra.mxu0 %v273
    %300 = vmatprep.subr.mxu0 0.0
    %301 = vmatpush1.msra.mxu0 %v274
    %302 = vmatprep.subr.mxu0 0.0
    %303 = vmatpush1.msra.mxu0 %v275
    %304 = vmatprep.subr.mxu0 0.0
    %305 = vmatpush1.msra.mxu0 %v276
    %306 = vmatprep.subr.mxu0 0.0
    %307 = vmatpush1.msra.mxu0 %v277
    %308 = vmatprep.subr.mxu0 0.0
    %309 = vmatpush1.msra.mxu0 %v278
    %310 = vmatprep.subr.mxu0 0.0
    %311 = vmatpush1.msra.mxu0 %v279
    %312 = vmatprep.subr.mxu0 0.0
    %313 = vmatpush1.msra.mxu0 %v280
    %314 = vmatprep.subr.mxu0 0.0
    %315 = vmatpush1.msra.mxu0 %v281
    %316 = vmatprep.subr.mxu0 0.0
    %317 = vmatpush1.msra.mxu0 %v282
    %318 = vmatprep.subr.mxu0 0.0
    %319 = vmatpush1.msra.mxu0 %v283
    %320 = vmatprep.subr.mxu0 0.0
    %321 = vmatpush1.msra.mxu0 %v284
    %322 = vmatprep.subr.mxu0 0.0
    %323 = vmatpush1.msra.mxu0 %v285
    %324 = vmatprep.subr.mxu0 0.0
    %325 = vmatpush1.msra.mxu0 %v286
    %326 = vmatprep.subr.mxu0 0.0
    %327 = vmatpush1.msra.mxu0 0.0
    %328 = vmatprep.subr.mxu0 0.0
    %329 = vmatpush1.msra.mxu0 0.0
    %330 = vmatprep.subr.mxu0 0.0
    %331 = vmatpush1.msra.mxu0 0.0
    %332 = vmatprep.subr.mxu0 0.0
    %333 = vmatpush1.msra.mxu0 0.0
    %334 = vmatprep.subr.mxu0 0.0
    %335 = vmatpush1.msra.mxu0 0.0
    %336 = vmatprep.subr.mxu0 0.0
    %337 = vmatpush1.msra.mxu0 0.0
    %338 = vmatprep.subr.mxu0 0.0
    %339 = vmatpush1.msra.mxu0 0.0
    %340 = vmatprep.subr.mxu0 0.0
    %341 = vmatpush1.msra.mxu0 0.0
    %342 = vmatprep.subr.mxu0 0.0
    %343 = vmatpush1.msra.mxu0 0.0
    %344 = vmatprep.subr.mxu0 0.0
    %345 = vmatpush1.msra.mxu0 0.0
    %346 = vmatprep.subr.mxu0 0.0
    %347 = vmatpush1.msra.mxu0 0.0
    %348 = vmatprep.subr.mxu0 0.0
    %349 = vmatpush1.msra.mxu0 0.0
    %350 = vmatprep.subr.mxu0 0.0
    %351 = vmatpush1.msra.mxu0 0.0
    %352 = vmatprep.subr.mxu0 0.0
    %353 = vmatpush1.msra.mxu0 0.0
    %354 = vmatprep.subr.mxu0 0.0
    %355 = vmatpush1.msra.mxu0 0.0
    %356 = vmatprep.subr.mxu0 0.0
    %357 = vmatpush1.msra.mxu0 0.0
    %358 = vmatprep.mubr.f32.mxu0 0.0
    %359 = vmatmul.mubr.f32.gmra.mrb[0].mxu0 %v267
    %v360 = vpop.f32.mrb[0].mxu0
    %v361 = vadd.f32 %v292, %v360
    %v362 = vpop.f32.mrb[0].mxu0
    %363 = vdwg.mxu0
    %364 = vst [vmem:[#allocation11] sm:$0xff] %v361
    // Predicated region
    $region46: #{tpu_custom_call.1} parent=1 // pred_check
      _
    $region47: #{tpu_custom_call.1} parent=1 // pred_check_branch
      %366 = sbr.rel (0) target = $region49
    $region48: #{tpu_custom_call.1} parent=1 // pred_region
      %s368 = ssub.s32 128, 128
      %369 = vsyncadd [#allocation4], %s368
      %s371 = sshll.u32 [#allocation10], 4
      %s372 = int_to_ptr.vmem [resolvable:$true] %s371
      %374 = dma.vmem_to_hbm [thread:$0]  %s372, 128, %s7, [#allocation4]
    $region49: #{tpu_custom_call.1} parent=1 // pred_fallthru
      _
    // Predicated region
    $region50: #{tpu_custom_call.1} parent=1 // pred_check
      _
    $region51: #{tpu_custom_call.1} parent=1 // pred_check_branch
      %376 = sbr.rel (0) target = $region53
    $region52: #{tpu_custom_call.1} parent=1 // pred_region
      %s378 = ssub.s32 128, 128
      %379 = vsyncadd [#allocation12], %s378
      %s381 = sshll.u32 [#allocation11], 4
      %s382 = int_to_ptr.vmem [resolvable:$true] %s381
      %384 = dma.vmem_to_hbm [thread:$0]  %s382, 128, %s8, [#allocation12]
    $region53: #{tpu_custom_call.1} parent=1 // pred_fallthru
      _
    // Predicated region
    $region54: #{tpu_custom_call.1} parent=1 // pred_check
      _
    $region55: #{tpu_custom_call.1} parent=1 // pred_check_branch
      %386 = sbr.rel (0) target = $region57
    $region56: #{tpu_custom_call.1} parent=1 // pred_region
      %387 = dma.done [#allocation4], 128
    $region57: #{tpu_custom_call.1} parent=1 // pred_fallthru
      _
    // Predicated region
    $region58: #{tpu_custom_call.1} parent=1 // pred_check
      _
    $region59: #{tpu_custom_call.1} parent=1 // pred_check_branch
      %389 = sbr.rel (0) target = $region61
    $region60: #{tpu_custom_call.1} parent=1 // pred_region
      %390 = dma.done [#allocation12], 128
    $region61: #{tpu_custom_call.1} parent=1 // pred_fallthru
      _
    %391 = vsyncpa [#allocation3], 1
    %392 = vsyncpa [#allocation6], 1
    %393 = vsyncpa [#allocation9], 1
    %394 = vsyncpa [#allocation4], 1
    %395 = vsyncpa [#allocation12], 1

</llo_original>
